<compile_context>
chip_gen: v5e
topology: v5e:2x2
jax: 0.10.0
libtpu: 0.0.40
codegen_flags: <defaults>
</compile_context>

<pallas_src>
import functools

import jax
import jax.numpy as jnp
from jax.experimental import pallas as pl
from jax.experimental.pallas import tpu as pltpu


def _round_up(v, mult):
    return ((v + mult - 1) // mult) * mult


_VMEM_BUDGET = 40 * 1024 * 1024   # residency decision budget (fits v7x 64 MiB)
_VMEM_LIMIT = 48 * 1024 * 1024    # explicit scoped-VMEM limit for Mosaic


# --------------------------- resident-weight path ---------------------------
def _ffn_resident_kernel(x_ref, w1_ref, b1_ref, w2_ref, b2_ref, o_ref):
    # grid = (m_tiles,). W1/W2/b1/b2 have constant block index -> VMEM-resident
    # across the whole grid; only the x / out row tiles are pipelined.
    h = jnp.dot(x_ref[...], w1_ref[...], preferred_element_type=jnp.float32)
    h = jnp.maximum(h + b1_ref[...], 0.0)  # bias + ReLU (f32 on the VPU)
    # TODO(synk): training-mode dropout (pltpu.prng_seed + prng_random_bits
    #             mask) omitted; eval-mode dropout is identity.
    y = jnp.dot(h.astype(w2_ref.dtype), w2_ref[...],
                preferred_element_type=jnp.float32)
    o_ref[...] = (y + b2_ref[...]).astype(o_ref.dtype)


# ------------------------ streaming (hidden-tiled) path ----------------------
def _ffn_stream_kernel_f32out(x_ref, w1_ref, b1_ref, w2_ref, b2_ref, o_ref):
    # f32 output: accumulate directly into the resident output block
    # (its block index is constant across the hidden axis), no scratch needed.
    j = pl.program_id(1)

    @pl.when(j == 0)
    def _():
        o_ref[...] = jnp.zeros_like(o_ref)

    h = jnp.dot(x_ref[...], w1_ref[...], preferred_element_type=jnp.float32)
    h = jnp.maximum(h + b1_ref[...], 0.0)
    o_ref[...] += jnp.dot(h.astype(w2_ref.dtype), w2_ref[...],
                          preferred_element_type=jnp.float32)

    @pl.when(j == pl.num_programs(1) - 1)
    def _():
        o_ref[...] += b2_ref[...]


def _ffn_stream_kernel_acc(x_ref, w1_ref, b1_ref, w2_ref, b2_ref, o_ref,
                           acc_ref):
    # Non-f32 output: f32 VMEM accumulator, cast + store on the last step.
    j = pl.program_id(1)

    @pl.when(j == 0)
    def _():
        acc_ref[...] = jnp.zeros_like(acc_ref)

    h = jnp.dot(x_ref[...], w1_ref[...], preferred_element_type=jnp.float32)
    h = jnp.maximum(h + b1_ref[...], 0.0)
    acc_ref[...] += jnp.dot(h.astype(w2_ref.dtype), w2_ref[...],
                            preferred_element_type=jnp.float32)

    @pl.when(j == pl.num_programs(1) - 1)
    def _():
        o_ref[...] = (acc_ref[...] + b2_ref[...]).astype(o_ref.dtype)


# ------------------------------- wrappers ------------------------------------
def make_ffn_params(w1, b1, w2, b2, compute_dtype=jnp.bfloat16):
    """Pad/cast Linear parameters once (hoisted out of the per-call path).

    w1: (idim, hidden), b1: (hidden,), w2: (hidden, idim), b2: (idim,)
    (torch nn.Linear weights already transposed for row-major x @ w).
    """
    idim, hidden = w1.shape
    idim_p = _round_up(idim, 128)
    hidden_p = _round_up(hidden, 128)
    w1_p = jnp.pad(w1, ((0, idim_p - idim), (0, hidden_p - hidden))).astype(compute_dtype)
    w2_p = jnp.pad(w2, ((0, hidden_p - hidden), (0, idim_p - idim))).astype(compute_dtype)
    b1_p = jnp.pad(b1, (0, hidden_p - hidden)).reshape(1, hidden_p).astype(jnp.float32)
    b2_p = jnp.pad(b2, (0, idim_p - idim)).reshape(1, idim_p).astype(jnp.float32)
    return w1_p, b1_p, w2_p, b2_p


@functools.partial(jax.jit, static_argnames=("tile_m", "tile_h", "compute_dtype"))
def ffn_apply(x, w1_p, b1_p, w2_p, b2_p, *,
              tile_m=512, tile_h=1024, compute_dtype=jnp.bfloat16):
    """x: (batch, seq, idim); params pre-padded/cast by make_ffn_params."""
    batch, seq, idim = x.shape
    m = batch * seq
    idim_p, hidden_p = w1_p.shape
    out_dtype = x.dtype
    cdt = jnp.dtype(compute_dtype)
    out_itemsize = jnp.dtype(out_dtype).itemsize
    row_align = 16 if cdt.itemsize == 2 else 8

    # Row tile: as large as requested; ensure >= 2 row tiles when m allows so
    # the 'parallel' axis can shard across both TensorCores on v7x.
    tm = min(tile_m, _round_up(m, row_align))
    if m >= 2 * row_align and _round_up(m, tm) // tm < 2:
        tm = _round_up((m + 1) // 2, row_align)
    m_p = _round_up(m, tm)
    n_mt = m_p // tm

    # Pad only what is actually needed: idim (first-matmul reduction dim, the
    # weights are already zero-padded there) and the ragged tail of m.
    x2d = x.reshape(m, idim)
    if (m_p, idim_p) != (m, idim):
        x2d = jnp.pad(x2d, ((0, m_p - m), (0, idim_p - idim)))
    x2d = x2d.astype(compute_dtype)

    # Static VMEM estimate for the weight-resident regime.
    resident_bytes = (
        2 * idim_p * hidden_p * cdt.itemsize      # W1 + W2 (single-buffered)
        + (hidden_p + idim_p) * 4                 # biases (f32)
        + 2 * tm * idim_p * cdt.itemsize          # double-buffered x tile
        + 2 * tm * idim_p * out_itemsize          # double-buffered out tile
        + tm * hidden_p * 4                       # f32 hidden intermediate
    )

    if resident_bytes <= _VMEM_BUDGET:
        # ---- weight-resident fast path: 1-D grid over row tiles ----
        cost = pl.CostEstimate(
            flops=4 * m_p * idim_p * hidden_p,
            transcendentals=0,
            bytes_accessed=(m_p * idim_p * cdt.itemsize           # x read once
                            + 2 * idim_p * hidden_p * cdt.itemsize  # weights once
                            + (hidden_p + idim_p) * 4
                            + m_p * idim_p * out_itemsize),        # out written once
        )
        out2d = pl.pallas_call(
            _ffn_resident_kernel,
            out_shape=jax.ShapeDtypeStruct((m_p, idim_p), out_dtype),
            grid=(n_mt,),
            in_specs=[
                pl.BlockSpec((tm, idim_p), lambda i: (i, 0)),        # x row tile
                pl.BlockSpec((idim_p, hidden_p), lambda i: (0, 0)),  # W1 resident
                pl.BlockSpec((1, hidden_p), lambda i: (0, 0)),       # b1 resident
                pl.BlockSpec((hidden_p, idim_p), lambda i: (0, 0)),  # W2 resident
                pl.BlockSpec((1, idim_p), lambda i: (0, 0)),         # b2 resident
            ],
            out_specs=pl.BlockSpec((tm, idim_p), lambda i: (i, 0)),
            compiler_params=pltpu.CompilerParams(
                dimension_semantics=("parallel",),
                vmem_limit_bytes=_VMEM_LIMIT),
            cost_estimate=cost,
        )(x2d, w1_p, b1_p, w2_p, b2_p)
    else:
        # ---- streaming fallback: tile the hidden axis (innermost, arbitrary) ----
        th = min(tile_h, hidden_p)
        hidden_pt = _round_up(hidden_p, th)
        if hidden_pt != hidden_p:
            w1_p = jnp.pad(w1_p, ((0, 0), (0, hidden_pt - hidden_p)))
            w2_p = jnp.pad(w2_p, ((0, hidden_pt - hidden_p), (0, 0)))
            b1_p = jnp.pad(b1_p, ((0, 0), (0, hidden_pt - hidden_p)))
            hidden_p = hidden_pt
        n_ht = hidden_p // th

        cost = pl.CostEstimate(
            flops=4 * m_p * idim_p * hidden_p,
            transcendentals=0,
            bytes_accessed=(m_p * idim_p * cdt.itemsize
                            # weights re-streamed once per row tile:
                            + n_mt * 2 * idim_p * hidden_p * cdt.itemsize
                            + n_mt * (hidden_p + idim_p) * 4
                            + m_p * idim_p * out_itemsize),
        )
        common = dict(
            out_shape=jax.ShapeDtypeStruct((m_p, idim_p), out_dtype),
            grid=(n_mt, n_ht),
            in_specs=[
                pl.BlockSpec((tm, idim_p), lambda i, j: (i, 0)),       # x row tile
                pl.BlockSpec((idim_p, th), lambda i, j: (0, j),        # W1 col slice
                             pipeline_mode=pl.Buffered(3)),
                pl.BlockSpec((1, th), lambda i, j: (0, j)),            # b1 slice
                pl.BlockSpec((th, idim_p), lambda i, j: (j, 0),        # W2 row slice
                             pipeline_mode=pl.Buffered(3)),
                pl.BlockSpec((1, idim_p), lambda i, j: (0, 0)),        # b2
            ],
            out_specs=pl.BlockSpec((tm, idim_p), lambda i, j: (i, 0)),
            compiler_params=pltpu.CompilerParams(
                dimension_semantics=("parallel", "arbitrary"),
                vmem_limit_bytes=_VMEM_LIMIT),
            cost_estimate=cost,
        )
        if jnp.dtype(out_dtype) == jnp.float32:
            out2d = pl.pallas_call(_ffn_stream_kernel_f32out, **common)(
                x2d, w1_p, b1_p, w2_p, b2_p)
        else:
            out2d = pl.pallas_call(
                _ffn_stream_kernel_acc,
                scratch_shapes=[pltpu.VMEM((tm, idim_p), jnp.float32)],
                **common)(x2d, w1_p, b1_p, w2_p, b2_p)

    return out2d[:m, :idim].reshape(batch, seq, idim)


def positionwise_feed_forward(x, w1, b1, w2, b2, **kwargs):
    """Convenience one-shot wrapper (prep + apply)."""
    params = make_ffn_params(w1, b1, w2, b2,
                             kwargs.get("compute_dtype", jnp.bfloat16))
    return ffn_apply(x, *params, **kwargs)


if __name__ == "__main__":
    # Small shapes consistent with the module's forward.
    batch, seq, idim, hidden = 2, 8, 16, 32

    key = jax.random.PRNGKey(0)
    kx, kw1, kb1, kw2, kb2 = jax.random.split(key, 5)

    x = jax.random.normal(kx, (batch, seq, idim), dtype=jnp.float32)
    # Params for nn.Linear(idim, hidden) / nn.Linear(hidden, idim), stored
    # transposed for row-major x @ w.
    w1 = jax.random.normal(kw1, (idim, hidden), dtype=jnp.float32) * 0.1
    b1 = jax.random.normal(kb1, (hidden,), dtype=jnp.float32) * 0.1
    w2 = jax.random.normal(kw2, (hidden, idim), dtype=jnp.float32) * 0.1
    b2 = jax.random.normal(kb2, (idim,), dtype=jnp.float32) * 0.1

    # Weight prep is done once, outside the per-call jitted path.
    params = make_ffn_params(w1, b1, w2, b2)
    out = ffn_apply(x, *params)
    out = jax.block_until_ready(out)

    # Pure-JAX f32 reference (dropout in eval mode == identity). Kernel runs
    # the MXU in bf16 with f32 accumulation, so use a bf16-appropriate tol.
    ref = jnp.maximum(x @ w1 + b1, 0.0) @ w2 + b2
    assert out.shape == (batch, seq, idim)
    assert jnp.allclose(out, ref, atol=3e-2, rtol=3e-2), "mismatch vs reference"

    print("KERNEL_OK")
</pallas_src>

<mosaic_0001>
module attributes {stable_mosaic.version = 11 : i64} {
  func.func @_ffn_resident_kernel(%arg0: i32, %arg1: memref<16x128xbf16, #tpu.memory_space<vmem>>, %arg2: memref<128x128xbf16, #tpu.memory_space<vmem>>, %arg3: memref<1x128xf32, #tpu.memory_space<vmem>>, %arg4: memref<128x128xbf16, #tpu.memory_space<vmem>>, %arg5: memref<1x128xf32, #tpu.memory_space<vmem>>, %arg6: memref<16x128xf32, #tpu.memory_space<vmem>>) attributes {dimension_semantics = [#tpu.dimension_semantics<parallel>], iteration_bounds = array<i64: 1>, scalar_prefetch = 0 : i64, scratch_operands = 0 : i64, tpu.core_type = #tpu.core_type<tc>, window_params = [{transform_indices = @transform_0, window_bounds = array<i64: 16, 128>}, {pipeline_mode = #tpu.pipeline_mode<synchronous>, transform_indices = @transform_1, window_bounds = array<i64: 128, 128>}, {pipeline_mode = #tpu.pipeline_mode<synchronous>, transform_indices = @transform_2, window_bounds = array<i64: 1, 128>}, {pipeline_mode = #tpu.pipeline_mode<synchronous>, transform_indices = @transform_3, window_bounds = array<i64: 128, 128>}, {pipeline_mode = #tpu.pipeline_mode<synchronous>, transform_indices = @transform_4, window_bounds = array<i64: 1, 128>}, {transform_indices = @transform_5, window_bounds = array<i64: 16, 128>}]} {
    %c0 = arith.constant 0 : index
    %c0_0 = arith.constant 0 : index
    %0 = vector.load %arg1[%c0, %c0_0] : memref<16x128xbf16, #tpu.memory_space<vmem>>, vector<16x128xbf16>
    %c0_1 = arith.constant 0 : index
    %c0_2 = arith.constant 0 : index
    %1 = vector.load %arg2[%c0_1, %c0_2] : memref<128x128xbf16, #tpu.memory_space<vmem>>, vector<128x128xbf16>
    %cst = arith.constant dense<0.000000e+00> : vector<16x128xf32>
    %2 = tpu.matmul %0, %1, %cst {dimension_numbers = #tpu.dot_dimension_numbers<[1], [0], [0], [1], [0, 0, 1, 1], [], []>} : vector<16x128xbf16>, vector<128x128xbf16>, vector<16x128xf32> -> vector<16x128xf32>
    %c0_3 = arith.constant 0 : index
    %c0_4 = arith.constant 0 : index
    %3 = vector.load %arg3[%c0_3, %c0_4] : memref<1x128xf32, #tpu.memory_space<vmem>>, vector<1x128xf32>
    %4 = vector.broadcast %3 : vector<1x128xf32> to vector<16x128xf32>
    %5 = arith.addf %2, %4 : vector<16x128xf32>
    %cst_5 = arith.constant 0.000000e+00 : f32
    %6 = vector.broadcast %cst_5 : f32 to vector<16x128xf32>
    %7 = arith.maximumf %5, %6 : vector<16x128xf32>
    %8 = arith.truncf %7 : vector<16x128xf32> to vector<16x128xbf16>
    %c0_6 = arith.constant 0 : index
    %c0_7 = arith.constant 0 : index
    %9 = vector.load %arg4[%c0_6, %c0_7] : memref<128x128xbf16, #tpu.memory_space<vmem>>, vector<128x128xbf16>
    %cst_8 = arith.constant dense<0.000000e+00> : vector<16x128xf32>
    %10 = tpu.matmul %8, %9, %cst_8 {dimension_numbers = #tpu.dot_dimension_numbers<[1], [0], [0], [1], [0, 0, 1, 1], [], []>} : vector<16x128xbf16>, vector<128x128xbf16>, vector<16x128xf32> -> vector<16x128xf32>
    %c0_9 = arith.constant 0 : index
    %c0_10 = arith.constant 0 : index
    %11 = vector.load %arg5[%c0_9, %c0_10] : memref<1x128xf32, #tpu.memory_space<vmem>>, vector<1x128xf32>
    %12 = vector.broadcast %11 : vector<1x128xf32> to vector<16x128xf32>
    %13 = arith.addf %10, %12 : vector<16x128xf32>
    %c0_11 = arith.constant 0 : index
    %c0_12 = arith.constant 0 : index
    %14 = vector.load %arg6[%c0_11, %c0_12] : memref<16x128xf32, #tpu.memory_space<vmem>>, vector<16x128xf32>
    tpu.vector_store %arg6[%c0_11, %c0_12], %13 {strides = array<i32>} : memref<16x128xf32, #tpu.memory_space<vmem>>, vector<16x128xf32>,
    return
  }
  func.func @transform_0(%arg0: i32) -> (i32, i32) {
    %c0_i32 = arith.constant 0 : i32
    %c0_i32_0 = arith.constant 0 : i32
    return %arg0, %c0_i32 : i32, i32
  }
  func.func @transform_1(%arg0: i32) -> (i32, i32) {
    %c0_i32 = arith.constant 0 : i32
    %c0_i32_0 = arith.constant 0 : i32
    %c0_i32_1 = arith.constant 0 : i32
    return %c0_i32, %c0_i32_0 : i32, i32
  }
  func.func @transform_2(%arg0: i32) -> (i32, i32) {
    %c0_i32 = arith.constant 0 : i32
    %c0_i32_0 = arith.constant 0 : i32
    %c0_i32_1 = arith.constant 0 : i32
    return %c0_i32, %c0_i32_0 : i32, i32
  }
  func.func @transform_3(%arg0: i32) -> (i32, i32) {
    %c0_i32 = arith.constant 0 : i32
    %c0_i32_0 = arith.constant 0 : i32
    %c0_i32_1 = arith.constant 0 : i32
    return %c0_i32, %c0_i32_0 : i32, i32
  }
  func.func @transform_4(%arg0: i32) -> (i32, i32) {
    %c0_i32 = arith.constant 0 : i32
    %c0_i32_0 = arith.constant 0 : i32
    %c0_i32_1 = arith.constant 0 : i32
    return %c0_i32, %c0_i32_0 : i32, i32
  }
  func.func @transform_5(%arg0: i32) -> (i32, i32) {
    %c0_i32 = arith.constant 0 : i32
    %c0_i32_0 = arith.constant 0 : i32
    return %arg0, %c0_i32 : i32, i32
  }
}

</mosaic_0001>

<llo_original>
// kernel: ffn_apply.1
$region0: #{ffn_apply.1}
  #allocation0 [shape = 'u32[]', space=smem, size = 0x4, offset = 0x4, fixed_abs, tag = 'smem constant byte address 0x4 - core index']
  #allocation1 [shape = 'u32[72,128]{1,0:T(1,128)}', space=vmem, size = 0x9000, scoped, tag = 'internal scratch']
  %s0 = inlined_call_operand.vmem [shape: bf16[16,128], index: 0, kind: input, shape index: {}]
  %s1 = inlined_call_operand.hbm [shape: bf16[128,128], index: 1, kind: input, shape index: {}]
  %s2 = inlined_call_operand.vmem [shape: f32[1,128], index: 2, kind: input, shape index: {}]
  %s3 = inlined_call_operand.hbm [shape: bf16[128,128], index: 3, kind: input, shape index: {}]
  %s4 = inlined_call_operand.vmem [shape: f32[1,128], index: 4, kind: input, shape index: {}]
  %s5 = inlined_call_operand.vmem [shape: f32[16,128], index: 5, kind: output, shape index: {}]
  %s6 = sld [smem:[#allocation0]]
  $region38: #{ffn_apply.1} parent=0
    _
  %s8 = ssub.s32 1, %s6
  %s9 = scalar_select 0, %s8, %s6
  $region1: #{ffn_apply.1} parent=0
    #allocation2 [shape = 'u8[32768]{0}', space=vmem, size = 0x8000, scoped, tag = 'input window, operand 1, single buffered']
    #allocation3 [shape = 's32[1]{0}', space=sflag, size = 0x4, scoped, tag = 'scoped memory for ffn_apply.1']
    #allocation4 [shape = 'u8[32768]{0}', space=vmem, size = 0x8000, scoped, tag = 'input window, operand 3, single buffered']
    #allocation5 [shape = 's32[1]{0}', space=sflag, size = 0x4, scoped, tag = 'scoped memory for ffn_apply.1']
    %10 = vsyncpa [#allocation3], 0
    %11 = vsyncpa [#allocation5], 0
    // Predicated region
    $region2: #{ffn_apply.1} parent=1 // pred_check
      _
    $region3: #{ffn_apply.1} parent=1 // pred_check_branch
      %13 = sbr.rel (0) target = $region5
    $region4: #{ffn_apply.1} parent=1 // pred_region
      _
    $region5: #{ffn_apply.1} parent=1 // pred_fallthru
      _
    // Predicated region
    $region6: #{ffn_apply.1} parent=1 // pred_check
      _
    $region7: #{ffn_apply.1} parent=1 // pred_check_branch
      %15 = sbr.rel (0) target = $region9
    $region8: #{ffn_apply.1} parent=1 // pred_region
      %17 = vsyncadd [#allocation3], 0
      %s18 = sshll.u32 %s1, 4
      %s19 = int_to_ptr.hbm [resolvable:$true] %s18
      %s20 = sshll.u32 [#allocation2], 4
      %s21 = int_to_ptr.vmem [resolvable:$true] %s20
      %26 = dma.hbm_to_vmem [thread:$0]  %s19, 1024, %s21, [#allocation3], 64, 64, 4
    $region9: #{ffn_apply.1} parent=1 // pred_fallthru
      _
    // Predicated region
    $region10: #{ffn_apply.1} parent=1 // pred_check
      _
    $region11: #{ffn_apply.1} parent=1 // pred_check_branch
      %28 = sbr.rel (0) target = $region13
    $region12: #{ffn_apply.1} parent=1 // pred_region
      _
    $region13: #{ffn_apply.1} parent=1 // pred_fallthru
      _
    // Predicated region
    $region14: #{ffn_apply.1} parent=1 // pred_check
      _
    $region15: #{ffn_apply.1} parent=1 // pred_check_branch
      %30 = sbr.rel (0) target = $region17
    $region16: #{ffn_apply.1} parent=1 // pred_region
      %32 = vsyncadd [#allocation5], 0
      %s33 = sshll.u32 %s3, 4
      %s34 = int_to_ptr.hbm [resolvable:$true] %s33
      %s35 = sshll.u32 [#allocation4], 4
      %s36 = int_to_ptr.vmem [resolvable:$true] %s35
      %41 = dma.hbm_to_vmem [thread:$0]  %s34, 1024, %s36, [#allocation5], 64, 64, 4
    $region17: #{ffn_apply.1} parent=1 // pred_fallthru
      _
    // Predicated region
    $region18: #{ffn_apply.1} parent=1 // pred_check
      _
    $region19: #{ffn_apply.1} parent=1 // pred_check_branch
      %43 = sbr.rel (0) target = $region21
    $region20: #{ffn_apply.1} parent=1 // pred_region
      _
    $region21: #{ffn_apply.1} parent=1 // pred_fallthru
      _
    // Predicated region
    $region22: #{ffn_apply.1} parent=1 // pred_check
      _
    $region23: #{ffn_apply.1} parent=1 // pred_check_branch
      %45 = sbr.rel (0) target = $region25
    $region24: #{ffn_apply.1} parent=1 // pred_region
      %47 = dma.done [#allocation3], 1024
    $region25: #{ffn_apply.1} parent=1 // pred_fallthru
      _
    // Predicated region
    $region26: #{ffn_apply.1} parent=1 // pred_check
      _
    $region27: #{ffn_apply.1} parent=1 // pred_check_branch
      %49 = sbr.rel (0) target = $region29
    $region28: #{ffn_apply.1} parent=1 // pred_region
      %51 = dma.done [#allocation5], 1024
    $region29: #{ffn_apply.1} parent=1 // pred_fallthru
      _
    %v52 = vld [vmem:[%s0] sm:$0xf]
    %v53 = vld [vmem:[%s0 + $0x4] sm:$0xf]
    %v54 = vld [vmem:[#allocation2] sm:$0xf]
    %v55 = vld [vmem:[#allocation2 + $0x4] sm:$0xf]
    %v56 = vld [vmem:[#allocation2 + $0x8] sm:$0xf]
    %v57 = vld [vmem:[#allocation2 + $0xc] sm:$0xf]
    %v58 = vld [vmem:[#allocation2 + $0x10] sm:$0xf]
    %v59 = vld [vmem:[#allocation2 + $0x14] sm:$0xf]
    %v60 = vld [vmem:[#allocation2 + $0x18] sm:$0xf]
    %v61 = vld [vmem:[#allocation2 + $0x1c] sm:$0xf]
    %v62 = vld [vmem:[#allocation2 + $0x20] sm:$0xf]
    %v63 = vld [vmem:[#allocation2 + $0x24] sm:$0xf]
    %v64 = vld [vmem:[#allocation2 + $0x28] sm:$0xf]
    %v65 = vld [vmem:[#allocation2 + $0x2c] sm:$0xf]
    %v66 = vld [vmem:[#allocation2 + $0x30] sm:$0xf]
    %v67 = vld [vmem:[#allocation2 + $0x34] sm:$0xf]
    %v68 = vld [vmem:[#allocation2 + $0x38] sm:$0xf]
    %v69 = vld [vmem:[#allocation2 + $0x3c] sm:$0xf]
    %v70 = vld [vmem:[%s2] sm:$0x1]
    %v72 = vperm.slane %v70, 0
    %v76 = vunpack.c.l.b16 %v52
    %v77 = vunpack.c.l.b16 %v53
    %v78 = vpack.c.b16 %v77, %v76
    %v96 = vunpack.c.l.b16 %v54
    %v97 = vunpack.c.l.b16 %v55
    %v98 = vunpack.c.l.b16 %v56
    %v99 = vunpack.c.l.b16 %v57
    %v100 = vunpack.c.l.b16 %v58
    %v101 = vunpack.c.l.b16 %v59
    %v102 = vunpack.c.l.b16 %v60
    %v103 = vunpack.c.l.b16 %v61
    %v104 = vunpack.c.l.b16 %v62
    %v105 = vunpack.c.l.b16 %v63
    %v106 = vunpack.c.l.b16 %v64
    %v107 = vunpack.c.l.b16 %v65
    %v108 = vunpack.c.l.b16 %v66
    %v109 = vunpack.c.l.b16 %v67
    %v110 = vunpack.c.l.b16 %v68
    %v111 = vunpack.c.l.b16 %v69
    %v112 = vpack.c.b16 %v97, %v96
    %v113 = vpack.c.b16 %v99, %v98
    %v114 = vpack.c.b16 %v101, %v100
    %v115 = vpack.c.b16 %v103, %v102
    %v116 = vpack.c.b16 %v105, %v104
    %v117 = vpack.c.b16 %v107, %v106
    %v118 = vpack.c.b16 %v109, %v108
    %v119 = vpack.c.b16 %v111, %v110
    %128 = vmatpush.bf16.msra.mxu0 %v119
    %129 = vmatpush.bf16.msra.mxu0 %v118
    %130 = vmatpush.bf16.msra.mxu0 %v117
    %131 = vmatpush.bf16.msra.mxu0 %v116
    %132 = vmatpush.bf16.msra.mxu0 %v115
    %133 = vmatpush.bf16.msra.mxu0 %v114
    %134 = vmatpush.bf16.msra.mxu0 %v113
    %135 = vmatpush.bf16.msra.mxu0 %v112
    %136 = vmatmul.bf16.gmra.mxu0 %v78
    %v137 = vpop.f32.mrf.mxu0
    %v138 = vadd.f32 %v72, %v137
    %v139 = vpop.f32.mrf.mxu0
    %v140 = vadd.f32 %v72, %v139
    %141 = vdwg.mxu0
    %v142 = vmax.f32 %v138, 0.0
    %v143 = vmax.f32 %v140, 0.0
    %v144 = vpack.c.bf16 %v143, %v142
    %v145 = vld [vmem:[#allocation4] sm:$0xf]
    %v146 = vld [vmem:[#allocation4 + $0x4] sm:$0xf]
    %v147 = vld [vmem:[#allocation4 + $0x8] sm:$0xf]
    %v148 = vld [vmem:[#allocation4 + $0xc] sm:$0xf]
    %v149 = vld [vmem:[#allocation4 + $0x10] sm:$0xf]
    %v150 = vld [vmem:[#allocation4 + $0x14] sm:$0xf]
    %v151 = vld [vmem:[#allocation4 + $0x18] sm:$0xf]
    %v152 = vld [vmem:[#allocation4 + $0x1c] sm:$0xf]
    %v153 = vld [vmem:[#allocation4 + $0x20] sm:$0xf]
    %v154 = vld [vmem:[#allocation4 + $0x24] sm:$0xf]
    %v155 = vld [vmem:[#allocation4 + $0x28] sm:$0xf]
    %v156 = vld [vmem:[#allocation4 + $0x2c] sm:$0xf]
    %v157 = vld [vmem:[#allocation4 + $0x30] sm:$0xf]
    %v158 = vld [vmem:[#allocation4 + $0x34] sm:$0xf]
    %v159 = vld [vmem:[#allocation4 + $0x38] sm:$0xf]
    %v160 = vld [vmem:[#allocation4 + $0x3c] sm:$0xf]
    %v161 = vld [vmem:[%s4] sm:$0x1]
    %v163 = vperm.slane %v161, 0
    %v181 = vunpack.c.l.b16 %v145
    %v182 = vunpack.c.l.b16 %v146
    %v183 = vunpack.c.l.b16 %v147
    %v184 = vunpack.c.l.b16 %v148
    %v185 = vunpack.c.l.b16 %v149
    %v186 = vunpack.c.l.b16 %v150
    %v187 = vunpack.c.l.b16 %v151
    %v188 = vunpack.c.l.b16 %v152
    %v189 = vunpack.c.l.b16 %v153
    %v190 = vunpack.c.l.b16 %v154
    %v191 = vunpack.c.l.b16 %v155
    %v192 = vunpack.c.l.b16 %v156
    %v193 = vunpack.c.l.b16 %v157
    %v194 = vunpack.c.l.b16 %v158
    %v195 = vunpack.c.l.b16 %v159
    %v196 = vunpack.c.l.b16 %v160
    %v197 = vpack.c.b16 %v182, %v181
    %v198 = vpack.c.b16 %v184, %v183
    %v199 = vpack.c.b16 %v186, %v185
    %v200 = vpack.c.b16 %v188, %v187
    %v201 = vpack.c.b16 %v190, %v189
    %v202 = vpack.c.b16 %v192, %v191
    %v203 = vpack.c.b16 %v194, %v193
    %v204 = vpack.c.b16 %v196, %v195
    %213 = vmatpush.bf16.msra.mxu0 %v204
    %214 = vmatpush.bf16.msra.mxu0 %v203
    %215 = vmatpush.bf16.msra.mxu0 %v202
    %216 = vmatpush.bf16.msra.mxu0 %v201
    %217 = vmatpush.bf16.msra.mxu0 %v200
    %218 = vmatpush.bf16.msra.mxu0 %v199
    %219 = vmatpush.bf16.msra.mxu0 %v198
    %220 = vmatpush.bf16.msra.mxu0 %v197
    %221 = vmatmul.bf16.gmra.mxu0 %v144
    %v222 = vpop.f32.mrf.mxu0
    %v223 = vadd.f32 %v163, %v222
    %v224 = vpop.f32.mrf.mxu0
    %v225 = vadd.f32 %v163, %v224
    %226 = vdwg.mxu0
    %227 = vst [vmem:[%s5] sm:$0xff] %v223
    %228 = vst [vmem:[%s5 + $0x8] sm:$0xff] %v225
    // Predicated region
    $region30: #{ffn_apply.1} parent=1 // pred_check
      _
    $region31: #{ffn_apply.1} parent=1 // pred_check_branch
      %230 = sbr.rel (0) target = $region33
    $region32: #{ffn_apply.1} parent=1 // pred_region
      _
    $region33: #{ffn_apply.1} parent=1 // pred_fallthru
      _
    // Predicated region
    $region34: #{ffn_apply.1} parent=1 // pred_check
      _
    $region35: #{ffn_apply.1} parent=1 // pred_check_branch
      %232 = sbr.rel (0) target = $region37
    $region36: #{ffn_apply.1} parent=1 // pred_region
      _
    $region37: #{ffn_apply.1} parent=1 // pred_fallthru
      _
    %233 = vsyncpa [#allocation3], 1
    %234 = vsyncpa [#allocation5], 1

</llo_original>
